<compile_context>
chip_gen: v7x
topology: tpu7x:2x2x1
jax: 0.10.0
libtpu: 0.0.40
codegen_flags: <defaults>
</compile_context>

<pallas_src>
import jax
import jax.numpy as jnp
from jax.experimental import pallas as pl
from jax.experimental.pallas import tpu as pltpu


def _im2seq_kernel(x_ref, o_ref):
    # x_ref: (Cb, Wb) tile (batch dim squeezed); o_ref: (Wb, Cb) tile.
    # TODO(synk): bf16/int8 on v7x could use a packed transpose (pltpu.bitcast
    # adjacent pairs to u32, 32-bit transpose, fix interleave with pltpu.roll)
    # to halve XLU work; plain transpose stays DMA-bound at these shapes.
    o_ref[...] = jnp.transpose(x_ref[...], (1, 0))


def _tpu_generation():
    """Return (is_v7x_class, per_buffer_tile_budget_bytes, vmem_cap_bytes)."""
    vmem_phys = 128 << 20
    try:
        info = pltpu.get_tpu_info()
        vmem_phys = int(getattr(info, "vmem_capacity_bytes", vmem_phys))
    except Exception:  # pragma: no cover - conservative fallback off-TPU
        pass
    if vmem_phys <= (64 << 20):
        # v7x-class: high HBM BW makes per-step overhead relatively expensive
        # -> bigger tiles; only 64 MiB physical VMEM -> lower cap.
        return True, 4 << 20, 36 << 20
    # v5e / v6e: ~2 MiB tiles are near-roofline; plenty of VMEM headroom.
    return False, 2 << 20, 64 << 20


def _even_split_tile(extent):
    """A multiple-of-128 tile (< extent) splitting `extent` into exactly two
    blocks, or None if impossible (extent <= 128)."""
    if extent <= 128:
        return None
    half = (extent + 1) // 2
    tile = ((half + 127) // 128) * 128
    return tile if tile < extent else None


def _select_tiles(C, W, itemsize, per_buffer_budget, want_even_grid):
    """Pick (Cb, Wb) that are multiples of 128 or full extents (legal blocks)."""
    max_elems = max(per_buffer_budget // itemsize, 8 * 128)

    if C * W <= max_elems:
        Cb, Wb = C, W
        if want_even_grid:
            # v7x, B == 1: grid would be (1,1,1) -> one TensorCore idles.
            # Split one dim into exactly two blocks; prefer a mask-free split.
            if W >= 256 and W % 256 == 0:
                Wb = W // 2
            elif C >= 256 and C % 256 == 0:
                Cb = C // 2
            else:
                s = _even_split_tile(W)
                if s is not None:
                    Wb = s
                else:
                    s = _even_split_tile(C)
                    if s is not None:
                        Cb = s
        return Cb, Wb

    # Slab too big for one buffer.  Keep C full when possible: output tiles
    # (Wb, C) are contiguous, lane-dense HBM writes; input tiles (C, Wb) read
    # full rows.  Split W into multiples of 128.
    if C * 128 <= max_elems:
        Wb = (max_elems // C // 128) * 128
        return C, min(W, Wb)

    # C alone is too big: keep W full and split C into multiples of 128.
    if W * 128 <= max_elems:
        Cb = (max_elems // W // 128) * 128
        return min(C, Cb), W

    # Both dims huge: square-ish 128-multiple tiles.
    side = int(max_elems ** 0.5)
    side = max(128, (side // 128) * 128)
    return min(C, side), min(W, side)


def _check_tile(name, tile, extent):
    if not (0 < tile <= extent):
        raise ValueError(f"{name}={tile} must be in (0, {extent}]")
    if tile != extent and tile % 128 != 0:
        raise ValueError(
            f"{name}={tile} must be a multiple of 128 or the full extent "
            f"{extent} (TPU (8,128) block-tiling rule)")


def im2seq(x, *, tile_c: int | None = None, tile_w: int | None = None):
    """x: (B, C, 1, W) NCHW with H == 1  ->  (B, W, C)."""
    B, C, H, W = x.shape
    assert H == 1, "Im2Seq expects feature-map height == 1"
    x_sq = x.reshape(B, C, W)  # squeeze(dim=2): free for contiguous NCHW

    is_v7x, per_buf, vmem_cap = _tpu_generation()
    itemsize = jnp.dtype(x.dtype).itemsize

    if tile_c is None and tile_w is None:
        Cb, Wb = _select_tiles(C, W, itemsize, per_buf,
                               want_even_grid=(is_v7x and B == 1))
    else:
        Cb = tile_c if tile_c is not None else C
        Wb = tile_w if tile_w is not None else W
        _check_tile("tile_c", Cb, C)
        _check_tile("tile_w", Wb, W)

    grid = (B, pl.cdiv(W, Wb), pl.cdiv(C, Cb))

    # Actual need: double-buffered input tile + output tile + compiler slack,
    # clamped per generation (leave headroom under v7x's 64 MiB physical VMEM).
    tile_bytes = Cb * Wb * itemsize
    vmem_need = 4 * tile_bytes + (2 << 20)
    if vmem_need > vmem_cap:
        raise ValueError(
            f"tiles ({Cb}, {Wb}) need ~{vmem_need >> 20} MiB of VMEM, above the "
            f"{vmem_cap >> 20} MiB cap for this TPU generation; use smaller tiles")
    vmem_budget = min(max(vmem_need, 16 << 20), vmem_cap)

    return pl.pallas_call(
        _im2seq_kernel,
        out_shape=jax.ShapeDtypeStruct((B, W, C), x.dtype),
        grid_spec=pltpu.PrefetchScalarGridSpec(
            num_scalar_prefetch=0,
            grid=grid,
            # Batch dim squeezed out of the in-kernel view; block dims are
            # multiples of 128 or the full extents, so the (8,128) rule holds.
            in_specs=[
                pl.BlockSpec(
                    (pl.Squeezed(), Cb, Wb),
                    lambda b, wi, ci: (b, ci, wi),
                )
            ],
            # Output block last dim is Cb (full C or a 128-multiple) ->
            # lane-dense stores; full-extent tiles -> contiguous HBM writes.
            out_specs=pl.BlockSpec(
                (pl.Squeezed(), Wb, Cb),
                lambda b, wi, ci: (b, wi, ci),
            ),
        ),
        compiler_params=pltpu.CompilerParams(
            dimension_semantics=("parallel", "parallel", "parallel"),
            vmem_limit_bytes=vmem_budget,
        ),
    )(x_sq)


def _reference(x):
    B, C, H, W = x.shape
    return jnp.transpose(x.reshape(B, C, W), (0, 2, 1))


if __name__ == "__main__":
    key = jax.random.PRNGKey(0)

    # 1) Small shape matching the module spec (full-extent tile path).
    B, C, H, W = 2, 4, 1, 16
    x = jax.random.normal(key, (B, C, H, W), dtype=jnp.float32)
    out = jax.block_until_ready(im2seq(x))
    ref = _reference(x)
    assert out.shape == (B, W, C), out.shape
    assert out.dtype == x.dtype
    assert jnp.allclose(out, ref), "mismatch vs reference (small shape)"

    # 2) Typical OCR-neck shape: C not a multiple of 128.  Slab (192x640 f32,
    #    ~0.47 MiB) fits the per-buffer budget -> single contiguous block per
    #    batch element, no masked edge columns.
    B2, C2, W2 = 2, 192, 640
    x2 = jax.random.normal(jax.random.PRNGKey(1), (B2, C2, 1, W2),
                           dtype=jnp.float32)
    out2 = jax.block_until_ready(im2seq(x2))
    assert out2.shape == (B2, W2, C2), out2.shape
    assert jnp.allclose(out2, _reference(x2)), "mismatch vs reference (typical)"

    # 3) Larger B=1 shape (~2.75 MiB slab): exercises either the W sub-tiling
    #    path (v5e/v6e, 2 MiB budget) or the v7x even-split / full-extent path.
    B3, C3, W3 = 1, 256, 2688
    x3 = jax.random.normal(jax.random.PRNGKey(2), (B3, C3, 1, W3),
                           dtype=jnp.float32)
    out3 = jax.block_until_ready(im2seq(x3))
    assert out3.shape == (B3, W3, C3), out3.shape
    assert jnp.allclose(out3, _reference(x3)), "mismatch vs reference (tiled)"

    print("KERNEL_OK")
</pallas_src>

<mosaic_0001>
module attributes {stable_mosaic.version = 11 : i64} {
  func.func @_im2seq_kernel(%arg0: i32, %arg1: i32, %arg2: i32, %arg3: memref<1x4x16xf32, #tpu.memory_space<vmem>>, %arg4: memref<1x16x4xf32, #tpu.memory_space<vmem>>) attributes {dimension_semantics = [#tpu.dimension_semantics<parallel>, #tpu.dimension_semantics<parallel>, #tpu.dimension_semantics<parallel>], iteration_bounds = array<i64: 2, 1, 1>, scalar_prefetch = 0 : i64, scratch_operands = 0 : i64, tpu.core_type = #tpu.core_type<tc>, window_params = [{transform_indices = @transform_0, window_bounds = array<i64: 1, 4, 16>}, {transform_indices = @transform_1, window_bounds = array<i64: 1, 16, 4>}]} {
    %c0 = arith.constant 0 : index
    %c0_0 = arith.constant 0 : index
    %c0_1 = arith.constant 0 : index
    %0 = vector.load %arg3[%c0, %c0_0, %c0_1] : memref<1x4x16xf32, #tpu.memory_space<vmem>>, vector<1x4x16xf32>
    %1 = vector.shape_cast %0 : vector<1x4x16xf32> to vector<4x16xf32>
    %2 = tpu.transpose %1, [1, 0] : vector<4x16xf32> -> vector<16x4xf32>
    %c0_2 = arith.constant 0 : index
    %c0_3 = arith.constant 0 : index
    %c0_4 = arith.constant 0 : index
    %3 = vector.load %arg4[%c0_2, %c0_3, %c0_4] : memref<1x16x4xf32, #tpu.memory_space<vmem>>, vector<1x16x4xf32>
    %4 = vector.shape_cast %3 : vector<1x16x4xf32> to vector<16x4xf32>
    %5 = vector.shape_cast %2 : vector<16x4xf32> to vector<1x16x4xf32>
    tpu.vector_store %arg4[%c0_2, %c0_3, %c0_4], %5 {strides = array<i32>} : memref<1x16x4xf32, #tpu.memory_space<vmem>>, vector<1x16x4xf32>,
    return
  }
  func.func @transform_0(%arg0: i32, %arg1: i32, %arg2: i32) -> (i32, i32, i32) {
    %c0_i32 = arith.constant 0 : i32
    return %arg0, %arg2, %arg1 : i32, i32, i32
  }
  func.func @transform_1(%arg0: i32, %arg1: i32, %arg2: i32) -> (i32, i32, i32) {
    %c0_i32 = arith.constant 0 : i32
    return %arg0, %arg1, %arg2 : i32, i32, i32
  }
}

</mosaic_0001>

<llo_original>
// kernel: tpu_custom_call.1
$region0: #{tpu_custom_call.1}
  #allocation0 [shape = 'u32[]', space=smem, size = 0x4, offset = 0x4, fixed_abs, tag = 'smem constant byte address 0x4 - core index']
  #allocation1 [shape = 'u32[144,128]{1,0:T(1,128)}', space=vmem, size = 0x12000, scoped, tag = 'internal scratch']
  %s0 = inlined_call_operand.hbm [shape: f32[2,4,16], index: 0, kind: input, shape index: {}]
  %s1 = inlined_call_operand.vmem [shape: f32[2,16,4], index: 1, kind: output, shape index: {}]
  %s2 = sld [smem:[#allocation0]]
  $region41: #{tpu_custom_call.1} parent=0
    _
  %s4 = ssub.s32 1, %s2
  %s5 = scalar_select 0, %s4, %s2
  $region1: #{tpu_custom_call.1} parent=0
    #allocation2 [shape = 'u8[4096]{0}', space=vmem, size = 0x1000, scoped, tag = 'input window, operand 0']
    #allocation3 [shape = 's32[2]{0}', space=sflag, size = 0x8, scoped, tag = 'scoped memory for tpu_custom_call.1']
    %6 = vsyncpa [#allocation3], 0
    %s7 = scalar_lea.sflag [#allocation3], 1
    %8 = vsyncpa %s7, 0
    loop: start=0, step=1, limit=4
    $region2: #{tpu_custom_call.1} parent=1 // loop_pre_header
      _
    $region3: #{tpu_custom_call.1} parent=1 // loop_header
      %s10 = sphi 0, %s14
      %p11 = scmp.ge.s32.totalorder %s10, 4
      %s17 = sphi 0, %s36
      %s18 = sphi 0, %s32
      %s19 = sphi 0, %s28
      %s20 = sphi 0, %s17
      %s21 = sphi 0, %s18
      %s22 = sphi 0, %s19
      %s23 = sphi 0, %s20
      %s24 = sphi 0, %s21
      %s25 = sphi 0, %s22
      %s43 = sphi 0, %s45
      %s46 = sphi 0, %s43
      %s47 = sphi 0, %s46
      %s63 = sphi 0, %s47
      %s73 = sphi 0, %s75
      %s76 = sphi 0, %s73
      %s77 = sphi 0, %s76
      %s93 = sphi 0, %s77
    $region4: #{tpu_custom_call.1} parent=1 // loop_header_branch
      %13 = sbr.rel (%p11) target = $region8
    $region5: #{tpu_custom_call.1} parent=1 // loop_body
      %s15 = ssub.s32 %s10, 1
      %s16 = ssub.s32 %s10, 2
      %s26 = sadd.s32 1, %s19
      %p27 = scmp.ge.s32.totalorder %s26, 1
      %s28 = scalar_select %p27, 0, %s26
      %s29 = sadd.s32 1, %s18
      %s30 = scalar_select %p27, %s29, %s18
      %p31 = scmp.ge.s32.totalorder %s30, 1
      %s32 = scalar_select %p31, 0, %s30
      %s33 = sadd.s32 1, %s17
      %s34 = scalar_select %p31, %s33, %s17
      %p35 = scmp.ge.s32.totalorder %s34, 2
      %s36 = scalar_select %p35, 0, %s34
      %s37 = ssub.s32 %s17, %s36
      %s38 = ssub.s32 %s19, %s28
      %s39 = sor.u32 %s37, %s38
      %s40 = ssub.s32 %s18, %s32
      %s41 = sor.u32 %s39, %s40
      %p42 = scmp.eq.s32.totalorder %s41, 0
      %s44 = sadd.s32 %s43, 1
      %s45 = scalar_select %p42, %s43, %s44
      %p48 = pneg %p42
      %p49 = scmp.eq.s32.totalorder %s10, 1
      %p50 = por %p48, %p49
      %p51 = scmp.ne.s32.totalorder %s43, %s46
      %p52 = scmp.eq.s32.totalorder %s10, 0
      %p53 = por %p51, %p52
      %p54 = scmp.ne.s32.totalorder %s43, %s46
      %p55 = scmp.eq.s32.totalorder %s15, 1
      %p56 = por %p54, %p55
      %p57 = scmp.ne.s32.totalorder %s46, %s47
      %p58 = scmp.eq.s32.totalorder %s15, 0
      %p59 = por %p57, %p58
      %p60 = scmp.ne.s32.totalorder %s46, %s47
      %p61 = scmp.eq.s32.totalorder %s16, 1
      %p62 = por %p60, %p61
      %p64 = scmp.ne.s32.totalorder %s47, %s63
      %p65 = scmp.eq.s32.totalorder %s16, 0
      %p66 = por %p64, %p65
      %s67 = ssub.s32 %s17, %s36
      %s68 = ssub.s32 %s18, %s32
      %s69 = sor.u32 %s67, %s68
      %s70 = ssub.s32 %s19, %s28
      %s71 = sor.u32 %s69, %s70
      %p72 = scmp.eq.s32.totalorder %s71, 0
      %s74 = sadd.s32 %s73, 1
      %s75 = scalar_select %p72, %s73, %s74
      %p78 = pneg %p72
      %p79 = scmp.eq.s32.totalorder %s10, 1
      %p80 = por %p78, %p79
      %p81 = scmp.ne.s32.totalorder %s73, %s76
      %p82 = scmp.eq.s32.totalorder %s10, 0
      %p83 = por %p81, %p82
      %p84 = scmp.ne.s32.totalorder %s73, %s76
      %p85 = scmp.eq.s32.totalorder %s15, 1
      %p86 = por %p84, %p85
      %p87 = scmp.ne.s32.totalorder %s76, %s77
      %p88 = scmp.eq.s32.totalorder %s15, 0
      %p89 = por %p87, %p88
      %p90 = scmp.ne.s32.totalorder %s76, %s77
      %p91 = scmp.eq.s32.totalorder %s16, 1
      %p92 = por %p90, %p91
      %p94 = scmp.ne.s32.totalorder %s77, %s93
      %p95 = scmp.eq.s32.totalorder %s16, 0
      %p96 = por %p94, %p95
      %p97 = scmp.le.s32.totalorder 1, %s10
      %p98 = scmp.lt.s32.totalorder %s10, 3
      %p99 = pnand %p97, %p98
      %p100 = pneg %p99
      // Predicated region
      $region9: #{tpu_custom_call.1} parent=5 // pred_check
        _
      $region10: #{tpu_custom_call.1} parent=5 // pred_check_branch
        %102 = sbr.rel (%p99) target = $region12
      $region11: #{tpu_custom_call.1} parent=5 // pred_region
        %s103 = ssub.s32 %s10, 1
      $region12: #{tpu_custom_call.1} parent=5 // pred_fallthru
        _
      %p104 = scmp.lt.s32.totalorder %s10, 2
      // Predicated region
      $region13: #{tpu_custom_call.1} parent=5 // pred_check
        %p105 = pneg %p104
      $region14: #{tpu_custom_call.1} parent=5 // pred_check_branch
        %107 = sbr.rel (%p105) target = $region16
      $region15: #{tpu_custom_call.1} parent=5 // pred_region
        // Predicated region
        $region17: #{tpu_custom_call.1} parent=15 // pred_check
          %p108 = pneg %p53
        $region18: #{tpu_custom_call.1} parent=15 // pred_check_branch
          %110 = sbr.rel (%p108) target = $region20
        $region19: #{tpu_custom_call.1} parent=15 // pred_region
          %s111 = sand.u32 %s43, 1
          %s112 = scalar_lea.sflag [#allocation3], %s111
          %s113 = sand.u32 %s43, 1
          %s114 = smul.addr %s113, 4
          %s115 = scalar_lea.vmem [#allocation2], %s114
          %s117 = ssub.s32 64, 64
          %118 = vsyncadd %s112, %s117
          %s119 = sadd.s32 %s18, %s19
          %s120 = sadd.s32 %s119, %s17
          %s121 = smul.addr %s120, 64
          %s122 = scalar_lea.hbm %s0, %s121
          %s124 = sshll.u32 %s115, 4
          %s125 = int_to_ptr.vmem [resolvable:$true] %s124
          %127 = dma.hbm_to_vmem [thread:$0]  %s122, 64, %s125, %s112
        $region20: #{tpu_custom_call.1} parent=15 // pred_fallthru
          _
      $region16: #{tpu_custom_call.1} parent=5 // pred_fallthru
        _
      %p128 = scmp.le.s32.totalorder 1, %s10
      %p129 = scmp.lt.s32.totalorder %s10, 3
      %p130 = pnand %p128, %p129
      %p131 = pneg %p130
      // Predicated region
      $region21: #{tpu_custom_call.1} parent=5 // pred_check
        _
      $region22: #{tpu_custom_call.1} parent=5 // pred_check_branch
        %133 = sbr.rel (%p130) target = $region24
      $region23: #{tpu_custom_call.1} parent=5 // pred_region
        %s134 = ssub.s32 %s10, 1
        %s135 = sand.u32 %s46, 1
        %s136 = scalar_lea.sflag [#allocation3], %s135
        %s137 = sand.u32 %s46, 1
        %s138 = smul.addr %s137, 4
        %s139 = scalar_lea.vmem [#allocation2], %s138
        // Predicated region
        $region25: #{tpu_custom_call.1} parent=23 // pred_check
          %p140 = pneg %p59
        $region26: #{tpu_custom_call.1} parent=23 // pred_check_branch
          %142 = sbr.rel (%p140) target = $region28
        $region27: #{tpu_custom_call.1} parent=23 // pred_region
          %143 = dma.done %s136, 64
        $region28: #{tpu_custom_call.1} parent=23 // pred_fallthru
          _
        %s144 = sand.u32 %s46, 1
        %s145 = scalar_lea.sflag [#allocation3], %s144
        %s146 = sand.u32 %s46, 1
        %s147 = smul.addr %s146, 4
        %s148 = scalar_lea.vmem [#allocation2], %s147
        %p149 = pneg %p59
        %p150 = pneg %p56
        %p151 = pneg %p89
        %p152 = pneg %p86
        %s153 = smul.u32 2, %s21
        %p154 = scmp.lt.s32.totalorder %s20, 1
        %s155 = scalar_select %p154, %s20, 1
        %p156 = scmp.lt.s32.totalorder %s153, 1
        %s157 = scalar_select %p156, %s153, 1
        %p158 = scmp.lt.s32.totalorder %s22, 0
        %s159 = scalar_select %p158, %s22, 0
        %s160 = sadd.s32 %s159, %s157
        %s161 = smul.addr %s155, 2
        %s162 = sadd.s32 %s160, %s161
        %s163 = smul.addr %s162, 8
        %s164 = scalar_lea.vmem %s1, %s163
        %s165 = smul.u32 2, %s21
        %p166 = scmp.lt.s32.totalorder %s20, 1
        %s167 = scalar_select %p166, %s20, 1
        %p168 = scmp.lt.s32.totalorder %s165, 1
        %s169 = scalar_select %p168, %s165, 1
        %p170 = scmp.lt.s32.totalorder %s22, 0
        %s171 = scalar_select %p170, %s22, 0
        %s172 = sadd.s32 %s171, %s169
        %s173 = smul.addr %s167, 2
        %s174 = sadd.s32 %s172, %s173
        %s175 = smul.addr %s174, 8
        %s176 = scalar_lea.vmem %s1, %s175
        %s177 = smul.u32 2, %s21
        %v178 = vld [vmem:[%s139] sm:$0xf]
        %179 = vxpose.xlu0.b32.start [1/16] %v178, 128
        %180 = vxpose.xlu0.b32.cont [2/16] 0.0, 128
        %181 = vxpose.xlu0.b32.cont [3/16] 0.0, 128
        %182 = vxpose.xlu0.b32.cont [4/16] 0.0, 128
        %183 = vxpose.xlu0.b32.cont [5/16] 0.0, 128
        %184 = vxpose.xlu0.b32.cont [6/16] 0.0, 128
        %185 = vxpose.xlu0.b32.cont [7/16] 0.0, 128
        %186 = vxpose.xlu0.b32.cont [8/16] 0.0, 128
        %187 = vxpose.xlu0.b32.cont [9/16] 0.0, 128
        %188 = vxpose.xlu0.b32.cont [10/16] 0.0, 128
        %189 = vxpose.xlu0.b32.cont [11/16] 0.0, 128
        %190 = vxpose.xlu0.b32.cont [12/16] 0.0, 128
        %191 = vxpose.xlu0.b32.cont [13/16] 0.0, 128
        %192 = vxpose.xlu0.b32.cont [14/16] 0.0, 128
        %193 = vxpose.xlu0.b32.cont [15/16] 0.0, 128
        %194 = vxpose.xlu0.b32.end [16/16] 0.0, 128
        %v195 = vpop.trf.xlu0
        %v196 = vpop.trf.xlu0
        %v197 = vpop.trf.xlu0
        %v198 = vpop.trf.xlu0
        %v199 = vpop.trf.xlu0
        %v200 = vpop.trf.xlu0
        %v201 = vpop.trf.xlu0
        %v202 = vpop.trf.xlu0
        %v203 = vpop.trf.xlu0
        %v204 = vpop.trf.xlu0
        %v205 = vpop.trf.xlu0
        %v206 = vpop.trf.xlu0
        %v207 = vpop.trf.xlu0
        %v208 = vpop.trf.xlu0
        %v209 = vpop.trf.xlu0
        %v210 = vpop.trf.xlu0
        %vm211 = vcmask 31744
        %212 = vst.msk [vmem:[%s176] sm:$0xff] %vm211, %v195
        %213 = vst.msk [vmem:[%s176 + $0x8] sm:$0xff] %vm211, %v196
        %s214 = smul.u32 2, %s21
        %p215 = scmp.lt.s32.totalorder %s20, 1
        %s216 = scalar_select %p215, %s20, 1
        %p217 = scmp.lt.s32.totalorder %s214, 1
        %s218 = scalar_select %p217, %s214, 1
        %p219 = scmp.lt.s32.totalorder %s22, 0
        %s220 = scalar_select %p219, %s22, 0
        %s221 = sadd.s32 %s220, %s218
        %s222 = smul.addr %s216, 2
        %s223 = sadd.s32 %s221, %s222
        %s224 = smul.addr %s223, 8
        %s225 = scalar_lea.vmem %s1, %s224
        // Predicated region
        $region29: #{tpu_custom_call.1} parent=23 // pred_check
          %p226 = pneg %p86
        $region30: #{tpu_custom_call.1} parent=23 // pred_check_branch
          %228 = sbr.rel (%p226) target = $region32
        $region31: #{tpu_custom_call.1} parent=23 // pred_region
          %s229 = smul.u32 2, %s21
        $region32: #{tpu_custom_call.1} parent=23 // pred_fallthru
          _
      $region24: #{tpu_custom_call.1} parent=5 // pred_fallthru
        _
      %p230 = scmp.le.s32.totalorder 2, %s10
      // Predicated region
      $region33: #{tpu_custom_call.1} parent=5 // pred_check
        %p231 = pneg %p230
      $region34: #{tpu_custom_call.1} parent=5 // pred_check_branch
        %233 = sbr.rel (%p231) target = $region36
      $region35: #{tpu_custom_call.1} parent=5 // pred_region
        %s234 = ssub.s32 %s10, 2
        // Predicated region
        $region37: #{tpu_custom_call.1} parent=35 // pred_check
          %p235 = pneg %p92
        $region38: #{tpu_custom_call.1} parent=35 // pred_check_branch
          %237 = sbr.rel (%p235) target = $region40
        $region39: #{tpu_custom_call.1} parent=35 // pred_region
          %s238 = smul.u32 2, %s24
          %p239 = scmp.lt.s32.totalorder %s23, 1
          %s240 = scalar_select %p239, %s23, 1
          %p241 = scmp.lt.s32.totalorder %s238, 1
          %s242 = scalar_select %p241, %s238, 1
          %p243 = scmp.lt.s32.totalorder %s25, 0
          %s244 = scalar_select %p243, %s25, 0
          %s245 = sadd.s32 %s244, %s242
          %s246 = smul.addr %s240, 2
          %s247 = sadd.s32 %s245, %s246
          %s248 = smul.addr %s247, 8
          %s249 = scalar_lea.vmem %s1, %s248
        $region40: #{tpu_custom_call.1} parent=35 // pred_fallthru
          _
      $region36: #{tpu_custom_call.1} parent=5 // pred_fallthru
        _
    $region6: #{tpu_custom_call.1} parent=1 // loop_footer
      %s14 = sadd.s32 1, %s10
    $region7: #{tpu_custom_call.1} parent=1 // loop_footer_branch
      %9 = sbr.rel target = $region3
    $region8: #{tpu_custom_call.1} parent=1 // loop_exit
      _
    %250 = vsyncpa [#allocation3], 1
    %s251 = scalar_lea.sflag [#allocation3], 1
    %252 = vsyncpa %s251, 1

</llo_original>
